<compile_context>
chip_gen: v5e
topology: v5e:2x2
jax: 0.10.0
libtpu: 0.0.40
codegen_flags: <defaults>
</compile_context>

<pallas_src>
import functools

import jax
import jax.numpy as jnp
from jax.experimental import pallas as pl
from jax.experimental.pallas import tpu as pltpu

LANE = 128  # TPU vreg lane width


def mlp_kernel(x_ref, w1_ref, b1_ref, w2_ref, b2_ref, o_ref):
    # hidden = relu(x @ W1 + b1)
    h = jnp.dot(x_ref[...], w1_ref[...], preferred_element_type=jnp.float32)
    h = jnp.maximum(h + b1_ref[...], 0.0)  # b1 is (1, n_h), broadcasts over rows
    # out = hidden @ W2 + b2   (W2/b2 are lane-padded; pad columns are zeros)
    out = jnp.dot(h, w2_ref[...], preferred_element_type=jnp.float32) + b2_ref[...]
    o_ref[...] = out.astype(o_ref.dtype)


def _round_up(n, m):
    return ((n + m - 1) // m) * m


@functools.partial(jax.jit, static_argnames=("b_tile",))
def net_forward(x, w1, b1, w2, b2, *, b_tile=128):
    """x: (B, n_i); w1: (n_i, n_h); b1: (1, n_h); w2: (n_h, n_o); b2: (1, n_o)."""
    B, n_i = x.shape
    n_h = w1.shape[1]
    n_o = w2.shape[1]

    # Lane-dense output: pad n_o up to a multiple of 128 so every output store
    # is an unmasked full-lane vst. Pad columns are exact zeros (zero weight,
    # zero bias) so the valid columns are untouched.
    n_o_p = _round_up(n_o, LANE)
    if n_o_p != n_o:
        w2 = jnp.pad(w2, ((0, 0), (0, n_o_p - n_o)))
        b2 = jnp.pad(b2, ((0, 0), (0, n_o_p - n_o)))

    # Pad batch up to a multiple of the batch tile; extra rows are junk-in,
    # junk-out and sliced away below.
    b_tile = min(b_tile, _round_up(B, 8))
    B_p = _round_up(B, b_tile)
    if B_p != B:
        x = jnp.pad(x, ((0, B_p - B), (0, 0)))

    grid = (B_p // b_tile,)

    out = pl.pallas_call(
        mlp_kernel,
        out_shape=jax.ShapeDtypeStruct((B_p, n_o_p), jnp.float32),
        grid=grid,
        in_specs=[
            # x tile streams over the batch grid axis.
            pl.BlockSpec((b_tile, n_i), lambda i: (i, 0)),
            # Weights/biases: constant index_map -> resident in VMEM, DMA'd once.
            pl.BlockSpec((n_i, n_h), lambda i: (0, 0)),
            pl.BlockSpec((1, n_h), lambda i: (0, 0)),
            pl.BlockSpec((n_h, n_o_p), lambda i: (0, 0)),
            pl.BlockSpec((1, n_o_p), lambda i: (0, 0)),
        ],
        out_specs=pl.BlockSpec((b_tile, n_o_p), lambda i: (i, 0)),
        compiler_params=pltpu.CompilerParams(
            # Batch axis is independent work -> shard across TCs on v7x.
            dimension_semantics=("parallel",),
        ),
    )(x, w1, b1, w2, b2)

    # Drop batch padding and the lane padding of the output dimension.
    return out[:B, :n_o]


if __name__ == "__main__":
    # Module: Net(n_i, n_h, n_o) = Linear(n_i, n_h) -> relu -> relu -> Linear(n_h, n_o)
    n_i, n_h, n_o = 32, 64, 16
    batch = 200  # enough rows to exercise the batch grid (b_tile=128 -> 2 steps)

    key = jax.random.PRNGKey(0)
    kx, kw1, kb1, kw2, kb2 = jax.random.split(key, 5)

    x = jax.random.normal(kx, (batch, n_i), dtype=jnp.float32)

    # weight.data.normal_(0, 0.1) in PyTorch; stored here as (in, out) = W.T
    w1 = 0.1 * jax.random.normal(kw1, (n_i, n_h), dtype=jnp.float32)
    w2 = 0.1 * jax.random.normal(kw2, (n_h, n_o), dtype=jnp.float32)
    # PyTorch Linear bias default: U(-1/sqrt(fan_in), 1/sqrt(fan_in))
    b1 = jax.random.uniform(kb1, (1, n_h), dtype=jnp.float32,
                            minval=-1.0 / (n_i ** 0.5), maxval=1.0 / (n_i ** 0.5))
    b2 = jax.random.uniform(kb2, (1, n_o), dtype=jnp.float32,
                            minval=-1.0 / (n_h ** 0.5), maxval=1.0 / (n_h ** 0.5))

    out = net_forward(x, w1, b1, w2, b2)
    jax.block_until_ready(out)

    # Sanity check against plain-JAX reference (relu applied twice == once).
    ref = jnp.maximum(x @ w1 + b1, 0.0) @ w2 + b2
    assert out.shape == (batch, n_o)
    assert jnp.allclose(out, ref, atol=1e-5, rtol=1e-5)

    print("KERNEL_OK")
</pallas_src>

<mosaic_0001>
module attributes {stable_mosaic.version = 11 : i64} {
  func.func @mlp_kernel(%arg0: i32, %arg1: memref<128x32xf32, #tpu.memory_space<vmem>>, %arg2: memref<32x64xf32, #tpu.memory_space<vmem>>, %arg3: memref<1x64xf32, #tpu.memory_space<vmem>>, %arg4: memref<64x128xf32, #tpu.memory_space<vmem>>, %arg5: memref<1x128xf32, #tpu.memory_space<vmem>>, %arg6: memref<128x128xf32, #tpu.memory_space<vmem>>) attributes {dimension_semantics = [#tpu.dimension_semantics<parallel>], iteration_bounds = array<i64: 2>, scalar_prefetch = 0 : i64, scratch_operands = 0 : i64, tpu.core_type = #tpu.core_type<tc>, window_params = [{transform_indices = @transform_0, window_bounds = array<i64: 128, 32>}, {pipeline_mode = #tpu.pipeline_mode<synchronous>, transform_indices = @transform_1, window_bounds = array<i64: 32, 64>}, {pipeline_mode = #tpu.pipeline_mode<synchronous>, transform_indices = @transform_2, window_bounds = array<i64: 1, 64>}, {pipeline_mode = #tpu.pipeline_mode<synchronous>, transform_indices = @transform_3, window_bounds = array<i64: 64, 128>}, {pipeline_mode = #tpu.pipeline_mode<synchronous>, transform_indices = @transform_4, window_bounds = array<i64: 1, 128>}, {transform_indices = @transform_5, window_bounds = array<i64: 128, 128>}]} {
    %c0 = arith.constant 0 : index
    %c0_0 = arith.constant 0 : index
    %0 = vector.load %arg1[%c0, %c0_0] : memref<128x32xf32, #tpu.memory_space<vmem>>, vector<128x32xf32>
    %c0_1 = arith.constant 0 : index
    %c0_2 = arith.constant 0 : index
    %1 = vector.load %arg2[%c0_1, %c0_2] : memref<32x64xf32, #tpu.memory_space<vmem>>, vector<32x64xf32>
    %cst = arith.constant dense<0.000000e+00> : vector<128x64xf32>
    %2 = tpu.matmul %0, %1, %cst {dimension_numbers = #tpu.dot_dimension_numbers<[1], [0], [0], [1], [0, 0, 1, 1], [], []>} : vector<128x32xf32>, vector<32x64xf32>, vector<128x64xf32> -> vector<128x64xf32>
    %c0_3 = arith.constant 0 : index
    %c0_4 = arith.constant 0 : index
    %3 = vector.load %arg3[%c0_3, %c0_4] : memref<1x64xf32, #tpu.memory_space<vmem>>, vector<1x64xf32>
    %4 = vector.broadcast %3 : vector<1x64xf32> to vector<128x64xf32>
    %5 = arith.addf %2, %4 : vector<128x64xf32>
    %cst_5 = arith.constant 0.000000e+00 : f32
    %6 = vector.broadcast %cst_5 : f32 to vector<128x64xf32>
    %7 = arith.maximumf %5, %6 : vector<128x64xf32>
    %c0_6 = arith.constant 0 : index
    %c0_7 = arith.constant 0 : index
    %8 = vector.load %arg4[%c0_6, %c0_7] : memref<64x128xf32, #tpu.memory_space<vmem>>, vector<64x128xf32>
    %cst_8 = arith.constant dense<0.000000e+00> : vector<128x128xf32>
    %9 = tpu.matmul %7, %8, %cst_8 {dimension_numbers = #tpu.dot_dimension_numbers<[1], [0], [0], [1], [0, 0, 1, 1], [], []>} : vector<128x64xf32>, vector<64x128xf32>, vector<128x128xf32> -> vector<128x128xf32>
    %c0_9 = arith.constant 0 : index
    %c0_10 = arith.constant 0 : index
    %10 = vector.load %arg5[%c0_9, %c0_10] : memref<1x128xf32, #tpu.memory_space<vmem>>, vector<1x128xf32>
    %11 = vector.broadcast %10 : vector<1x128xf32> to vector<128x128xf32>
    %12 = arith.addf %9, %11 : vector<128x128xf32>
    %c0_11 = arith.constant 0 : index
    %c0_12 = arith.constant 0 : index
    %13 = vector.load %arg6[%c0_11, %c0_12] : memref<128x128xf32, #tpu.memory_space<vmem>>, vector<128x128xf32>
    tpu.vector_store %arg6[%c0_11, %c0_12], %12 {strides = array<i32>} : memref<128x128xf32, #tpu.memory_space<vmem>>, vector<128x128xf32>,
    return
  }
  func.func @transform_0(%arg0: i32) -> (i32, i32) {
    %c0_i32 = arith.constant 0 : i32
    %c0_i32_0 = arith.constant 0 : i32
    return %arg0, %c0_i32 : i32, i32
  }
  func.func @transform_1(%arg0: i32) -> (i32, i32) {
    %c0_i32 = arith.constant 0 : i32
    %c0_i32_0 = arith.constant 0 : i32
    %c0_i32_1 = arith.constant 0 : i32
    return %c0_i32, %c0_i32_0 : i32, i32
  }
  func.func @transform_2(%arg0: i32) -> (i32, i32) {
    %c0_i32 = arith.constant 0 : i32
    %c0_i32_0 = arith.constant 0 : i32
    %c0_i32_1 = arith.constant 0 : i32
    return %c0_i32, %c0_i32_0 : i32, i32
  }
  func.func @transform_3(%arg0: i32) -> (i32, i32) {
    %c0_i32 = arith.constant 0 : i32
    %c0_i32_0 = arith.constant 0 : i32
    %c0_i32_1 = arith.constant 0 : i32
    return %c0_i32, %c0_i32_0 : i32, i32
  }
  func.func @transform_4(%arg0: i32) -> (i32, i32) {
    %c0_i32 = arith.constant 0 : i32
    %c0_i32_0 = arith.constant 0 : i32
    %c0_i32_1 = arith.constant 0 : i32
    return %c0_i32, %c0_i32_0 : i32, i32
  }
  func.func @transform_5(%arg0: i32) -> (i32, i32) {
    %c0_i32 = arith.constant 0 : i32
    %c0_i32_0 = arith.constant 0 : i32
    return %arg0, %c0_i32 : i32, i32
  }
}

</mosaic_0001>

<llo_original>
// kernel: net_forward.1
$region0: #{net_forward.1}
  #allocation0 [shape = 'u32[]', space=smem, size = 0x4, offset = 0x4, fixed_abs, tag = 'smem constant byte address 0x4 - core index']
  #allocation1 [shape = 'u32[72,128]{1,0:T(1,128)}', space=vmem, size = 0x9000, scoped, tag = 'internal scratch']
  %s0 = inlined_call_operand.vmem [shape: f32[256,32], index: 0, kind: input, shape index: {}]
  %s1 = inlined_call_operand.vmem [shape: f32[32,64], index: 1, kind: input, shape index: {}]
  %s2 = inlined_call_operand.vmem [shape: f32[1,64], index: 2, kind: input, shape index: {}]
  %s3 = inlined_call_operand.vmem [shape: f32[64,128], index: 3, kind: input, shape index: {}]
  %s4 = inlined_call_operand.vmem [shape: f32[1,128], index: 4, kind: input, shape index: {}]
  %s5 = inlined_call_operand.vmem [shape: f32[256,128], index: 5, kind: output, shape index: {}]
  %s6 = sld [smem:[#allocation0]]
  $region53: #{net_forward.1} parent=0
    _
  %s8 = ssub.s32 1, %s6
  %s9 = scalar_select 0, %s8, %s6
  loop: start=0, step=1, limit=4
  $region2: #{net_forward.1} parent=0 // loop_pre_header
    _
  $region3: #{net_forward.1} parent=0 // loop_header
    %s11 = sphi 0, %s15
    %p12 = scmp.ge.s32.totalorder %s11, 4
    %s21 = sphi 0, %s23
    %s24 = sphi 0, %s21
    %s25 = sphi 0, %s24
    %s41 = sphi 0, %s25
    %s45 = sphi 0, %s45
    %s47 = sphi 0, %s45
    %s48 = sphi 0, %s47
    %s62 = sphi 0, %s48
    %s66 = sphi 0, %s66
    %s68 = sphi 0, %s66
    %s69 = sphi 0, %s68
    %s83 = sphi 0, %s69
    %s87 = sphi 0, %s87
    %s89 = sphi 0, %s87
    %s90 = sphi 0, %s89
    %s104 = sphi 0, %s90
    %s108 = sphi 0, %s108
    %s110 = sphi 0, %s108
    %s111 = sphi 0, %s110
    %s125 = sphi 0, %s111
    %s131 = sphi 0, %s133
    %s134 = sphi 0, %s131
    %s135 = sphi 0, %s134
    %s151 = sphi 0, %s135
  $region4: #{net_forward.1} parent=0 // loop_header_branch
    %14 = sbr.rel (%p12) target = $region8
  $region5: #{net_forward.1} parent=0 // loop_body
    %s16 = ssub.s32 %s11, 1
    %s17 = ssub.s32 %s11, 2
    %s18 = sadd.s32 %s11, 1
    %s19 = ssub.s32 %s11, %s18
    %p20 = scmp.eq.s32.totalorder %s19, 0
    %s22 = sadd.s32 %s21, 1
    %s23 = scalar_select %p20, %s21, %s22
    %p26 = pneg %p20
    %p27 = scmp.eq.s32.totalorder %s11, 1
    %p28 = por %p26, %p27
    %p29 = scmp.ne.s32.totalorder %s21, %s24
    %p30 = scmp.eq.s32.totalorder %s11, 0
    %p31 = por %p29, %p30
    %p32 = scmp.ne.s32.totalorder %s21, %s24
    %p33 = scmp.eq.s32.totalorder %s16, 1
    %p34 = por %p32, %p33
    %p35 = scmp.ne.s32.totalorder %s24, %s25
    %p36 = scmp.eq.s32.totalorder %s16, 0
    %p37 = por %p35, %p36
    %p38 = scmp.ne.s32.totalorder %s24, %s25
    %p39 = scmp.eq.s32.totalorder %s17, 1
    %p40 = por %p38, %p39
    %p42 = scmp.ne.s32.totalorder %s25, %s41
    %p43 = scmp.eq.s32.totalorder %s17, 0
    %p44 = por %p42, %p43
    %s46 = sadd.s32 %s45, 1
    %p49 = scmp.eq.s32.totalorder %s11, 1
    %p50 = scmp.ne.s32.totalorder %s45, %s47
    %p51 = scmp.eq.s32.totalorder %s11, 0
    %p52 = por %p50, %p51
    %p53 = scmp.ne.s32.totalorder %s45, %s47
    %p54 = scmp.eq.s32.totalorder %s16, 1
    %p55 = por %p53, %p54
    %p56 = scmp.ne.s32.totalorder %s47, %s48
    %p57 = scmp.eq.s32.totalorder %s16, 0
    %p58 = por %p56, %p57
    %p59 = scmp.ne.s32.totalorder %s47, %s48
    %p60 = scmp.eq.s32.totalorder %s17, 1
    %p61 = por %p59, %p60
    %p63 = scmp.ne.s32.totalorder %s48, %s62
    %p64 = scmp.eq.s32.totalorder %s17, 0
    %p65 = por %p63, %p64
    %s67 = sadd.s32 %s66, 1
    %p70 = scmp.eq.s32.totalorder %s11, 1
    %p71 = scmp.ne.s32.totalorder %s66, %s68
    %p72 = scmp.eq.s32.totalorder %s11, 0
    %p73 = por %p71, %p72
    %p74 = scmp.ne.s32.totalorder %s66, %s68
    %p75 = scmp.eq.s32.totalorder %s16, 1
    %p76 = por %p74, %p75
    %p77 = scmp.ne.s32.totalorder %s68, %s69
    %p78 = scmp.eq.s32.totalorder %s16, 0
    %p79 = por %p77, %p78
    %p80 = scmp.ne.s32.totalorder %s68, %s69
    %p81 = scmp.eq.s32.totalorder %s17, 1
    %p82 = por %p80, %p81
    %p84 = scmp.ne.s32.totalorder %s69, %s83
    %p85 = scmp.eq.s32.totalorder %s17, 0
    %p86 = por %p84, %p85
    %s88 = sadd.s32 %s87, 1
    %p91 = scmp.eq.s32.totalorder %s11, 1
    %p92 = scmp.ne.s32.totalorder %s87, %s89
    %p93 = scmp.eq.s32.totalorder %s11, 0
    %p94 = por %p92, %p93
    %p95 = scmp.ne.s32.totalorder %s87, %s89
    %p96 = scmp.eq.s32.totalorder %s16, 1
    %p97 = por %p95, %p96
    %p98 = scmp.ne.s32.totalorder %s89, %s90
    %p99 = scmp.eq.s32.totalorder %s16, 0
    %p100 = por %p98, %p99
    %p101 = scmp.ne.s32.totalorder %s89, %s90
    %p102 = scmp.eq.s32.totalorder %s17, 1
    %p103 = por %p101, %p102
    %p105 = scmp.ne.s32.totalorder %s90, %s104
    %p106 = scmp.eq.s32.totalorder %s17, 0
    %p107 = por %p105, %p106
    %s109 = sadd.s32 %s108, 1
    %p112 = scmp.eq.s32.totalorder %s11, 1
    %p113 = scmp.ne.s32.totalorder %s108, %s110
    %p114 = scmp.eq.s32.totalorder %s11, 0
    %p115 = por %p113, %p114
    %p116 = scmp.ne.s32.totalorder %s108, %s110
    %p117 = scmp.eq.s32.totalorder %s16, 1
    %p118 = por %p116, %p117
    %p119 = scmp.ne.s32.totalorder %s110, %s111
    %p120 = scmp.eq.s32.totalorder %s16, 0
    %p121 = por %p119, %p120
    %p122 = scmp.ne.s32.totalorder %s110, %s111
    %p123 = scmp.eq.s32.totalorder %s17, 1
    %p124 = por %p122, %p123
    %p126 = scmp.ne.s32.totalorder %s111, %s125
    %p127 = scmp.eq.s32.totalorder %s17, 0
    %p128 = por %p126, %p127
    %s129 = ssub.s32 %s11, %s18
    %p130 = scmp.eq.s32.totalorder %s129, 0
    %s132 = sadd.s32 %s131, 1
    %s133 = scalar_select %p130, %s131, %s132
    %p136 = pneg %p130
    %p137 = scmp.eq.s32.totalorder %s11, 1
    %p138 = por %p136, %p137
    %p139 = scmp.ne.s32.totalorder %s131, %s134
    %p140 = scmp.eq.s32.totalorder %s11, 0
    %p141 = por %p139, %p140
    %p142 = scmp.ne.s32.totalorder %s131, %s134
    %p143 = scmp.eq.s32.totalorder %s16, 1
    %p144 = por %p142, %p143
    %p145 = scmp.ne.s32.totalorder %s134, %s135
    %p146 = scmp.eq.s32.totalorder %s16, 0
    %p147 = por %p145, %p146
    %p148 = scmp.ne.s32.totalorder %s134, %s135
    %p149 = scmp.eq.s32.totalorder %s17, 1
    %p150 = por %p148, %p149
    %p152 = scmp.ne.s32.totalorder %s135, %s151
    %p153 = scmp.eq.s32.totalorder %s17, 0
    %p154 = por %p152, %p153
    %p155 = scmp.le.s32.totalorder 1, %s11
    %p156 = scmp.lt.s32.totalorder %s11, 3
    %p157 = pnand %p155, %p156
    %p158 = pneg %p157
    // Predicated region
    $region9: #{net_forward.1} parent=5 // pred_check
      _
    $region10: #{net_forward.1} parent=5 // pred_check_branch
      %160 = sbr.rel (%p157) target = $region12
    $region11: #{net_forward.1} parent=5 // pred_region
      %s161 = ssub.s32 %s11, 1
      // Predicated region
      $region13: #{net_forward.1} parent=11 // pred_check
        %p162 = pneg %p58
      $region14: #{net_forward.1} parent=11 // pred_check_branch
        %164 = sbr.rel (%p162) target = $region16
      $region15: #{net_forward.1} parent=11 // pred_region
        _
      $region16: #{net_forward.1} parent=11 // pred_fallthru
        _
      // Predicated region
      $region17: #{net_forward.1} parent=11 // pred_check
        %p165 = pneg %p79
      $region18: #{net_forward.1} parent=11 // pred_check_branch
        %167 = sbr.rel (%p165) target = $region20
      $region19: #{net_forward.1} parent=11 // pred_region
        _
      $region20: #{net_forward.1} parent=11 // pred_fallthru
        _
      // Predicated region
      $region21: #{net_forward.1} parent=11 // pred_check
        %p168 = pneg %p100
      $region22: #{net_forward.1} parent=11 // pred_check_branch
        %170 = sbr.rel (%p168) target = $region24
      $region23: #{net_forward.1} parent=11 // pred_region
        _
      $region24: #{net_forward.1} parent=11 // pred_fallthru
        _
      // Predicated region
      $region25: #{net_forward.1} parent=11 // pred_check
        %p171 = pneg %p121
      $region26: #{net_forward.1} parent=11 // pred_check_branch
        %173 = sbr.rel (%p171) target = $region28
      $region27: #{net_forward.1} parent=11 // pred_region
        _
      $region28: #{net_forward.1} parent=11 // pred_fallthru
        _
    $region12: #{net_forward.1} parent=5 // pred_fallthru
      _
    %p174 = scmp.lt.s32.totalorder %s11, 2
    // Predicated region
    $region29: #{net_forward.1} parent=5 // pred_check
      %p175 = pneg %p174
    $region30: #{net_forward.1} parent=5 // pred_check_branch
      %177 = sbr.rel (%p175) target = $region32
    $region31: #{net_forward.1} parent=5 // pred_region
      // Predicated region
      $region33: #{net_forward.1} parent=31 // pred_check
        %p178 = pneg %p31
      $region34: #{net_forward.1} parent=31 // pred_check_branch
        %180 = sbr.rel (%p178) target = $region36
      $region35: #{net_forward.1} parent=31 // pred_region
        %s181 = smul.u32 16, %s11
        %p182 = scmp.lt.s32.totalorder %s181, 31
        %s183 = scalar_select %p182, %s181, 31
        %s184 = smul.addr %s183, 8
        %s185 = scalar_lea.vmem %s0, %s184
        %s186 = smul.u32 16, %s11
      $region36: #{net_forward.1} parent=31 // pred_fallthru
        _
    $region32: #{net_forward.1} parent=5 // pred_fallthru
      _
    %p187 = scmp.le.s32.totalorder 1, %s11
    %p188 = scmp.lt.s32.totalorder %s11, 3
    %p189 = pnand %p187, %p188
    %p190 = pneg %p189
    // Predicated region
    $region37: #{net_forward.1} parent=5 // pred_check
      _
    $region38: #{net_forward.1} parent=5 // pred_check_branch
      %192 = sbr.rel (%p189) target = $region40
    $region39: #{net_forward.1} parent=5 // pred_region
      %s193 = ssub.s32 %s11, 1
      %s194 = smul.u32 16, %s16
      %p195 = scmp.lt.s32.totalorder %s194, 31
      %s196 = scalar_select %p195, %s194, 31
      %s197 = smul.addr %s196, 8
      %s198 = scalar_lea.vmem %s0, %s197
      %p199 = pneg %p37
      %p200 = pneg %p34
      %p201 = pneg %p58
      %p202 = pneg %p55
      %p203 = pneg %p79
      %p204 = pneg %p76
      %p205 = pneg %p100
      %p206 = pneg %p97
      %p207 = pneg %p121
      %p208 = pneg %p118
      %p209 = pneg %p147
      %p210 = pneg %p144
      %s211 = smul.u32 16, %s16
      %p212 = scmp.lt.s32.totalorder %s211, 31
      %s213 = scalar_select %p212, %s211, 31
      %s214 = smul.addr %s213, 8
      %s215 = scalar_lea.vmem %s5, %s214
      %s216 = smul.u32 16, %s16
      %p217 = scmp.lt.s32.totalorder %s216, 31
      %s218 = scalar_select %p217, %s216, 31
      %s219 = smul.addr %s218, 8
      %s220 = scalar_lea.vmem %s0, %s219
      %s221 = smul.u32 16, %s16
      %s222 = smul.u32 16, %s16
      %p223 = scmp.lt.s32.totalorder %s222, 31
      %s224 = scalar_select %p223, %s222, 31
      %s225 = smul.addr %s224, 8
      %s226 = scalar_lea.vmem %s5, %s225
      %s227 = smul.u32 16, %s16
      %v228 = vld [vmem:[%s220] sm:$0xff]
      %v229 = vld [vmem:[%s220 + $0x8] sm:$0xff]
      %v230 = vld [vmem:[%s220 + $0x10] sm:$0xff]
      %v231 = vld [vmem:[%s220 + $0x18] sm:$0xff]
      %v232 = vld [vmem:[%s220 + $0x20] sm:$0xff]
      %v233 = vld [vmem:[%s220 + $0x28] sm:$0xff]
      %v234 = vld [vmem:[%s220 + $0x30] sm:$0xff]
      %v235 = vld [vmem:[%s220 + $0x38] sm:$0xff]
      %v236 = vld [vmem:[%s220 + $0x40] sm:$0xff]
      %v237 = vld [vmem:[%s220 + $0x48] sm:$0xff]
      %v238 = vld [vmem:[%s220 + $0x50] sm:$0xff]
      %v239 = vld [vmem:[%s220 + $0x58] sm:$0xff]
      %v240 = vld [vmem:[%s220 + $0x60] sm:$0xff]
      %v241 = vld [vmem:[%s220 + $0x68] sm:$0xff]
      %v242 = vld [vmem:[%s220 + $0x70] sm:$0xff]
      %v243 = vld [vmem:[%s220 + $0x78] sm:$0xff]
      %v244 = vld [vmem:[%s1] sm:$0xff]
      %v245 = vld [vmem:[%s1 + $0x8] sm:$0xff]
      %v246 = vld [vmem:[%s1 + $0x10] sm:$0xff]
      %v247 = vld [vmem:[%s1 + $0x18] sm:$0xff]
      %v248 = vld [vmem:[%s2] sm:$0x1]
      %v250 = vperm.slane %v248, 0
      %vm252 = vcmask 261120
      %v254 = vsel %vm252, %v228, 0
      %v257 = vsel %vm252, %v229, 0
      %v260 = vsel %vm252, %v230, 0
      %v263 = vsel %vm252, %v231, 0
      %v266 = vsel %vm252, %v232, 0
      %v269 = vsel %vm252, %v233, 0
      %v272 = vsel %vm252, %v234, 0
      %v275 = vsel %vm252, %v235, 0
      %v278 = vsel %vm252, %v236, 0
      %v281 = vsel %vm252, %v237, 0
      %v284 = vsel %vm252, %v238, 0
      %v287 = vsel %vm252, %v239, 0
      %v290 = vsel %vm252, %v240, 0
      %v293 = vsel %vm252, %v241, 0
      %v296 = vsel %vm252, %v242, 0
      %v299 = vsel %vm252, %v243, 0
      %301 = vmatpush.msra.mxu0 0.0
      %302 = vmatpush.msra.mxu0 0.0
      %303 = vmatpush.msra.mxu0 0.0
      %304 = vmatpush.msra.mxu0 0.0
      %305 = vmatpush.msra.mxu0 0.0
      %306 = vmatpush.msra.mxu0 0.0
      %307 = vmatpush.msra.mxu0 0.0
      %308 = vmatpush.msra.mxu0 0.0
      %309 = vmatpush.msra.mxu0 0.0
      %310 = vmatpush.msra.mxu0 0.0
      %311 = vmatpush.msra.mxu0 0.0
      %312 = vmatpush.msra.mxu0 0.0
      %313 = vmatpush.msra.mxu0 %v247
      %314 = vmatpush.msra.mxu0 %v246
      %315 = vmatpush.msra.mxu0 %v245
      %316 = vmatpush.msra.mxu0 %v244
      %317 = vmatmul.f32.gmra.mxu0 %v254
      %v318 = vpop.f32.mrf.mxu0
      %v319 = vadd.f32 %v250, %v318
      %320 = vmatmul.f32.gmra.mxu0 %v257
      %v321 = vpop.f32.mrf.mxu0
      %v322 = vadd.f32 %v250, %v321
      %323 = vmatmul.f32.gmra.mxu0 %v260
      %v324 = vpop.f32.mrf.mxu0
      %v325 = vadd.f32 %v250, %v324
      %326 = vmatmul.f32.gmra.mxu0 %v263
      %v327 = vpop.f32.mrf.mxu0
      %v328 = vadd.f32 %v250, %v327
      %329 = vmatmul.f32.gmra.mxu0 %v266
      %v330 = vpop.f32.mrf.mxu0
      %v331 = vadd.f32 %v250, %v330
      %332 = vmatmul.f32.gmra.mxu0 %v269
      %v333 = vpop.f32.mrf.mxu0
      %v334 = vadd.f32 %v250, %v333
      %335 = vmatmul.f32.gmra.mxu0 %v272
      %v336 = vpop.f32.mrf.mxu0
      %v337 = vadd.f32 %v250, %v336
      %338 = vmatmul.f32.gmra.mxu0 %v275
      %v339 = vpop.f32.mrf.mxu0
      %v340 = vadd.f32 %v250, %v339
      %341 = vmatmul.f32.gmra.mxu0 %v278
      %v342 = vpop.f32.mrf.mxu0
      %v343 = vadd.f32 %v250, %v342
      %344 = vmatmul.f32.gmra.mxu0 %v281
      %v345 = vpop.f32.mrf.mxu0
      %v346 = vadd.f32 %v250, %v345
      %347 = vmatmul.f32.gmra.mxu0 %v284
      %v348 = vpop.f32.mrf.mxu0
      %v349 = vadd.f32 %v250, %v348
      %350 = vmatmul.f32.gmra.mxu0 %v287
      %v351 = vpop.f32.mrf.mxu0
      %v352 = vadd.f32 %v250, %v351
      %353 = vmatmul.f32.gmra.mxu0 %v290
      %v354 = vpop.f32.mrf.mxu0
      %v355 = vadd.f32 %v250, %v354
      %356 = vmatmul.f32.gmra.mxu0 %v293
      %v357 = vpop.f32.mrf.mxu0
      %v358 = vadd.f32 %v250, %v357
      %359 = vmatmul.f32.gmra.mxu0 %v296
      %v360 = vpop.f32.mrf.mxu0
      %v361 = vadd.f32 %v250, %v360
      %362 = vmatmul.f32.gmra.mxu0 %v299
      %v363 = vpop.f32.mrf.mxu0
      %v364 = vadd.f32 %v250, %v363
      %365 = vdwg.mxu0
      %v366 = vmax.f32 %v319, 0.0
      %v367 = vmax.f32 %v322, 0.0
      %v368 = vmax.f32 %v325, 0.0
      %v369 = vmax.f32 %v328, 0.0
      %v370 = vmax.f32 %v331, 0.0
      %v371 = vmax.f32 %v334, 0.0
      %v372 = vmax.f32 %v337, 0.0
      %v373 = vmax.f32 %v340, 0.0
      %v374 = vmax.f32 %v343, 0.0
      %v375 = vmax.f32 %v346, 0.0
      %v376 = vmax.f32 %v349, 0.0
      %v377 = vmax.f32 %v352, 0.0
      %v378 = vmax.f32 %v355, 0.0
      %v379 = vmax.f32 %v358, 0.0
      %v380 = vmax.f32 %v361, 0.0
      %v381 = vmax.f32 %v364, 0.0
      %v382 = vld [vmem:[%s3] sm:$0xff]
      %v383 = vld [vmem:[%s3 + $0x8] sm:$0xff]
      %v384 = vld [vmem:[%s3 + $0x10] sm:$0xff]
      %v385 = vld [vmem:[%s3 + $0x18] sm:$0xff]
      %v386 = vld [vmem:[%s3 + $0x20] sm:$0xff]
      %v387 = vld [vmem:[%s3 + $0x28] sm:$0xff]
      %v388 = vld [vmem:[%s3 + $0x30] sm:$0xff]
      %v389 = vld [vmem:[%s3 + $0x38] sm:$0xff]
      %v390 = vld [vmem:[%s4] sm:$0x1]
      %v392 = vperm.slane %v390, 0
      %vm394 = vcmask 523264
      %v396 = vsel %vm394, %v366, 0
      %v399 = vsel %vm394, %v367, 0
      %v402 = vsel %vm394, %v368, 0
      %v405 = vsel %vm394, %v369, 0
      %v408 = vsel %vm394, %v370, 0
      %v411 = vsel %vm394, %v371, 0
      %v414 = vsel %vm394, %v372, 0
      %v417 = vsel %vm394, %v373, 0
      %v420 = vsel %vm394, %v374, 0
      %v423 = vsel %vm394, %v375, 0
      %v426 = vsel %vm394, %v376, 0
      %v429 = vsel %vm394, %v377, 0
      %v432 = vsel %vm394, %v378, 0
      %v435 = vsel %vm394, %v379, 0
      %v438 = vsel %vm394, %v380, 0
      %v441 = vsel %vm394, %v381, 0
      %443 = vmatpush.msra.mxu0 0.0
      %444 = vmatpush.msra.mxu0 0.0
      %445 = vmatpush.msra.mxu0 0.0
      %446 = vmatpush.msra.mxu0 0.0
      %447 = vmatpush.msra.mxu0 0.0
      %448 = vmatpush.msra.mxu0 0.0
      %449 = vmatpush.msra.mxu0 0.0
      %450 = vmatpush.msra.mxu0 0.0
      %451 = vmatpush.msra.mxu0 %v389
      %452 = vmatpush.msra.mxu0 %v388
      %453 = vmatpush.msra.mxu0 %v387
      %454 = vmatpush.msra.mxu0 %v386
      %455 = vmatpush.msra.mxu0 %v385
      %456 = vmatpush.msra.mxu0 %v384
      %457 = vmatpush.msra.mxu0 %v383
      %458 = vmatpush.msra.mxu0 %v382
      %459 = vmatmul.f32.gmra.mxu0 %v396
      %v460 = vpop.f32.mrf.mxu0
      %v461 = vadd.f32 %v392, %v460
      %462 = vmatmul.f32.gmra.mxu0 %v399
      %v463 = vpop.f32.mrf.mxu0
      %v464 = vadd.f32 %v392, %v463
      %465 = vmatmul.f32.gmra.mxu0 %v402
      %v466 = vpop.f32.mrf.mxu0
      %v467 = vadd.f32 %v392, %v466
      %468 = vmatmul.f32.gmra.mxu0 %v405
      %v469 = vpop.f32.mrf.mxu0
      %v470 = vadd.f32 %v392, %v469
      %471 = vmatmul.f32.gmra.mxu0 %v408
      %v472 = vpop.f32.mrf.mxu0
      %v473 = vadd.f32 %v392, %v472
      %474 = vmatmul.f32.gmra.mxu0 %v411
      %v475 = vpop.f32.mrf.mxu0
      %v476 = vadd.f32 %v392, %v475
      %477 = vmatmul.f32.gmra.mxu0 %v414
      %v478 = vpop.f32.mrf.mxu0
      %v479 = vadd.f32 %v392, %v478
      %480 = vmatmul.f32.gmra.mxu0 %v417
      %v481 = vpop.f32.mrf.mxu0
      %v482 = vadd.f32 %v392, %v481
      %483 = vmatmul.f32.gmra.mxu0 %v420
      %v484 = vpop.f32.mrf.mxu0
      %v485 = vadd.f32 %v392, %v484
      %486 = vmatmul.f32.gmra.mxu0 %v423
      %v487 = vpop.f32.mrf.mxu0
      %v488 = vadd.f32 %v392, %v487
      %489 = vmatmul.f32.gmra.mxu0 %v426
      %v490 = vpop.f32.mrf.mxu0
      %v491 = vadd.f32 %v392, %v490
      %492 = vmatmul.f32.gmra.mxu0 %v429
      %v493 = vpop.f32.mrf.mxu0
      %v494 = vadd.f32 %v392, %v493
      %495 = vmatmul.f32.gmra.mxu0 %v432
      %v496 = vpop.f32.mrf.mxu0
      %v497 = vadd.f32 %v392, %v496
      %498 = vmatmul.f32.gmra.mxu0 %v435
      %v499 = vpop.f32.mrf.mxu0
      %v500 = vadd.f32 %v392, %v499
      %501 = vmatmul.f32.gmra.mxu0 %v438
      %v502 = vpop.f32.mrf.mxu0
      %v503 = vadd.f32 %v392, %v502
      %504 = vmatmul.f32.gmra.mxu0 %v441
      %v505 = vpop.f32.mrf.mxu0
      %v506 = vadd.f32 %v392, %v505
      %507 = vdwg.mxu0
      %508 = vst [vmem:[%s226] sm:$0xff] %v461
      %509 = vst [vmem:[%s226 + $0x8] sm:$0xff] %v464
      %510 = vst [vmem:[%s226 + $0x10] sm:$0xff] %v467
      %511 = vst [vmem:[%s226 + $0x18] sm:$0xff] %v470
      %512 = vst [vmem:[%s226 + $0x20] sm:$0xff] %v473
      %513 = vst [vmem:[%s226 + $0x28] sm:$0xff] %v476
      %514 = vst [vmem:[%s226 + $0x30] sm:$0xff] %v479
      %515 = vst [vmem:[%s226 + $0x38] sm:$0xff] %v482
      %516 = vst [vmem:[%s226 + $0x40] sm:$0xff] %v485
      %517 = vst [vmem:[%s226 + $0x48] sm:$0xff] %v488
      %518 = vst [vmem:[%s226 + $0x50] sm:$0xff] %v491
      %519 = vst [vmem:[%s226 + $0x58] sm:$0xff] %v494
      %520 = vst [vmem:[%s226 + $0x60] sm:$0xff] %v497
      %521 = vst [vmem:[%s226 + $0x68] sm:$0xff] %v500
      %522 = vst [vmem:[%s226 + $0x70] sm:$0xff] %v503
      %523 = vst [vmem:[%s226 + $0x78] sm:$0xff] %v506
      %s524 = smul.u32 16, %s16
      %p525 = scmp.lt.s32.totalorder %s524, 31
      %s526 = scalar_select %p525, %s524, 31
      %s527 = smul.addr %s526, 8
      %s528 = scalar_lea.vmem %s5, %s527
      // Predicated region
      $region41: #{net_forward.1} parent=39 // pred_check
        %p529 = pneg %p144
      $region42: #{net_forward.1} parent=39 // pred_check_branch
        %531 = sbr.rel (%p529) target = $region44
      $region43: #{net_forward.1} parent=39 // pred_region
        %s532 = smul.u32 16, %s16
      $region44: #{net_forward.1} parent=39 // pred_fallthru
        _
    $region40: #{net_forward.1} parent=5 // pred_fallthru
      _
    %p533 = scmp.le.s32.totalorder 2, %s11
    // Predicated region
    $region45: #{net_forward.1} parent=5 // pred_check
      %p534 = pneg %p533
    $region46: #{net_forward.1} parent=5 // pred_check_branch
      %536 = sbr.rel (%p534) target = $region48
    $region47: #{net_forward.1} parent=5 // pred_region
      %s537 = ssub.s32 %s11, 2
      // Predicated region
      $region49: #{net_forward.1} parent=47 // pred_check
        %p538 = pneg %p150
      $region50: #{net_forward.1} parent=47 // pred_check_branch
        %540 = sbr.rel (%p538) target = $region52
      $region51: #{net_forward.1} parent=47 // pred_region
        %s541 = smul.u32 16, %s17
        %p542 = scmp.lt.s32.totalorder %s541, 31
        %s543 = scalar_select %p542, %s541, 31
        %s544 = smul.addr %s543, 8
        %s545 = scalar_lea.vmem %s5, %s544
      $region52: #{net_forward.1} parent=47 // pred_fallthru
        _
    $region48: #{net_forward.1} parent=5 // pred_fallthru
      _
  $region6: #{net_forward.1} parent=0 // loop_footer
    %s15 = sadd.s32 1, %s11
  $region7: #{net_forward.1} parent=0 // loop_footer_branch
    %10 = sbr.rel target = $region3
  $region8: #{net_forward.1} parent=0 // loop_exit
    _

</llo_original>
